<compile_context>
chip_gen: v7x
topology: tpu7x:2x2x1
jax: 0.10.0
libtpu: 0.0.40
codegen_flags: <defaults>
</compile_context>

<pallas_src>
import jax
import jax.numpy as jnp
from jax.experimental import pallas as pl
from jax.experimental.pallas import tpu as pltpu


def _round_up(x, m):
    return ((x + m - 1) // m) * m


def _device_kind():
    try:
        return jax.devices()[0].device_kind.lower()
    except Exception:
        return ""


def _physical_vmem_bytes(kind):
    try:
        return int(pltpu.get_tpu_info().vmem_capacity_bytes)
    except Exception:
        pass
    if "7x" in kind or "v7" in kind:
        return 64 * 1024 * 1024
    if "v4" in kind or "v5" in kind or "v6" in kind:
        return 128 * 1024 * 1024
    return 64 * 1024 * 1024  # conservative default


def _use_bf16_epilogue(kind):
    # v6e/v7x VPUs have native bf16; v5e and older do not -> keep f32 there.
    return ("v6" in kind) or ("v7" in kind) or ("7x" in kind)


def _vmem_bytes(tile_b, tk, H_pad, act_itemsize):
    resident = H_pad * H_pad * 2                        # w2 bf16, single-buffered
    resident += 2 * H_pad * act_itemsize + H_pad * 4    # b1, b2, w3
    streamed = 2 * tile_b * tk * 2                      # x bf16, double-buffered
    streamed += 2 * tk * H_pad * 2                      # w1 bf16, double-buffered
    streamed += 2 * tile_b * 4                          # output, double-buffered
    scratch = tile_b * H_pad * 4                        # f32 layer-1 accumulator
    epilogue = 3 * tile_b * H_pad * 4                   # h1/h2 temporaries (upper bound)
    return resident + streamed + scratch + epilogue


def _choose_tiles(B, F_pad0, H_pad, vmem_cap, act_itemsize):
    b_full = _round_up(max(B, 16), 16)
    tb_opts = [t for t in (512, 256, 128, 64, 32, 16) if t <= b_full]
    if b_full < 512 and b_full not in tb_opts:
        tb_opts.insert(0, b_full)
    if not tb_opts:
        tb_opts = [16]
    tk_opts = [t for t in (512, 256, 128) if t <= F_pad0] or [128]
    for tb in tb_opts:
        for tk in tk_opts:
            if _vmem_bytes(tb, tk, H_pad, act_itemsize) <= 0.85 * vmem_cap:
                return tb, tk
    return tb_opts[-1], tk_opts[-1]


def _resident_spec(shape):
    index_map = lambda i, k: (0,) * len(shape)
    try:
        # Single-buffer constant-index (resident) operands: default pipelining
        # allocates 2 buffers even though the block never changes.
        return pl.BlockSpec(shape, index_map, pipeline_mode=pl.Buffered(1))
    except Exception:
        return pl.BlockSpec(shape, index_map)


def adv_net_kernel(x_ref, w1_ref, b1_ref, w2_ref, b2_ref, w3_ref, b3_ref,
                   o_ref, acc_ref):
    """One (batch-tile, K-tile) grid step of the CDAN discriminator forward.

    Grid: (batch tiles [parallel], in_feature tiles [arbitrary / reduction]).
      x_ref  : (tile_b, tk)    bf16  streamed over both grid axes
      w1_ref : (tk, H_pad)     bf16  streamed over the K axis
      b1_ref : (1, H_pad)      bf16 (v6e/v7x) or f32 (v5e)  resident
      w2_ref : (H_pad, H_pad)  bf16  resident
      b2_ref : (1, H_pad)      bf16/f32  resident
      w3_ref : (1, H_pad)      f32   resident
      b3_ref : (1,)            f32   SMEM scalar
      o_ref  : (1, 1, tile_b)  f32   lane-dense output row
      acc_ref: (tile_b, H_pad) f32   layer-1 accumulator scratch
    """
    k = pl.program_id(1)

    @pl.when(k == 0)
    def _():
        acc_ref[...] = jnp.zeros_like(acc_ref)

    # Layer 1 partial product on the MXU, f32 accumulation across K tiles.
    acc_ref[...] += jnp.dot(x_ref[...], w1_ref[...],
                            preferred_element_type=jnp.float32)

    @pl.when(k == pl.num_programs(1) - 1)
    def _():
        act_dtype = b1_ref.dtype  # bf16 on v6e/v7x, f32 on v5e and older
        # Layer 1 epilogue: bias + ReLU (dropout1 == identity in eval mode).
        h1 = jnp.maximum(acc_ref[...].astype(act_dtype) + b1_ref[...], 0.0)
        # Layer 2: bf16 MXU operands, f32 accumulate; bias + ReLU (dropout2 idem).
        h2 = jnp.dot(h1.astype(jnp.bfloat16), w2_ref[...],
                     preferred_element_type=jnp.float32)
        h2 = jnp.maximum(h2.astype(act_dtype) + b2_ref[...], 0.0)
        # Layer 3: an (H, 1) matmul would use 1/128 of the MXU output lanes;
        # do a VPU multiply + XLU lane reduction in f32 instead.
        y = jnp.sum(h2.astype(jnp.float32) * w3_ref[...], axis=-1)  # (tile_b,)
        y = y + b3_ref[0]
        o_ref[...] = jax.nn.sigmoid(y).reshape(o_ref.shape).astype(o_ref.dtype)


def adversarial_network_forward(x, params, *, tile_b=None, tile_k=None):
    """x: (B, in_feature) float32. params: dict with w1,b1,w2,b2,w3,b3.

    NOTE: weights here are stored (in, out); PyTorch nn.Linear stores (out, in),
    so transpose when importing pretrained weights.
    """
    B, F = x.shape
    H = params["w1"].shape[1]

    kind = _device_kind()
    phys_vmem = _physical_vmem_bytes(kind)
    vmem_cap = (3 * phys_vmem) // 4  # headroom: ~48 MiB v7x, ~96 MiB v5e/v6e
    act_dtype = jnp.bfloat16 if _use_bf16_epilogue(kind) else jnp.float32
    act_itemsize = jnp.dtype(act_dtype).itemsize

    H_pad = _round_up(H, 128)
    F_pad0 = _round_up(F, 128)

    tb, tk = _choose_tiles(B, F_pad0, H_pad, vmem_cap, act_itemsize)
    if tile_b is not None:
        tb = max(16, _round_up(tile_b, 16))
    if tile_k is not None:
        tk = max(128, _round_up(tile_k, 128))

    F_pad = _round_up(F, tk)
    B_pad = _round_up(B, tb)
    grid = (B_pad // tb, F_pad // tk)

    # Zero-pad on the host (padded rows/cols contribute exactly 0 to every
    # matmul / ReLU) and cast MXU operands to bf16.
    def pad2(a, r, c):
        return jnp.pad(a, ((0, r - a.shape[0]), (0, c - a.shape[1])))

    x_p = pad2(x, B_pad, F_pad).astype(jnp.bfloat16)
    w1_p = pad2(params["w1"], F_pad, H_pad).astype(jnp.bfloat16)
    w2_p = pad2(params["w2"], H_pad, H_pad).astype(jnp.bfloat16)
    b1_p = pad2(params["b1"].reshape(1, -1), 1, H_pad).astype(act_dtype)
    b2_p = pad2(params["b2"].reshape(1, -1), 1, H_pad).astype(act_dtype)
    w3_p = pad2(params["w3"].reshape(1, -1), 1, H_pad).astype(jnp.float32)
    b3_p = params["b3"].reshape(-1).astype(jnp.float32)  # (1,) SMEM scalar

    in_specs = [
        pl.BlockSpec((tb, tk), lambda i, k: (i, k)),        # x: streamed
        pl.BlockSpec((tk, H_pad), lambda i, k: (k, 0)),     # w1: streamed over K
        _resident_spec((1, H_pad)),                         # b1 (resident)
        _resident_spec((H_pad, H_pad)),                     # w2 (resident)
        _resident_spec((1, H_pad)),                         # b2 (resident)
        _resident_spec((1, H_pad)),                         # w3 (resident)
        pl.BlockSpec(memory_space=pltpu.MemorySpace.SMEM),  # b3 scalar
    ]
    out_specs = pl.BlockSpec((1, 1, tb), lambda i, k: (i, 0, 0))

    cost = pl.CostEstimate(
        flops=2 * B_pad * (F_pad * H_pad + H_pad * H_pad + H_pad),
        transcendentals=B_pad,
        bytes_accessed=(grid[0] * F_pad * H_pad * 2   # w1 re-read per batch tile
                        + B_pad * F_pad * 2
                        + H_pad * H_pad * 2
                        + 3 * H_pad * 4
                        + B_pad * 4),
    )

    out = pl.pallas_call(
        adv_net_kernel,
        out_shape=jax.ShapeDtypeStruct((grid[0], 1, tb), jnp.float32),
        grid_spec=pltpu.PrefetchScalarGridSpec(
            num_scalar_prefetch=0,
            grid=grid,
            in_specs=in_specs,
            out_specs=out_specs,
            scratch_shapes=[pltpu.VMEM((tb, H_pad), jnp.float32)],
        ),
        compiler_params=pltpu.CompilerParams(
            dimension_semantics=("parallel", "arbitrary"),
            vmem_limit_bytes=int(vmem_cap),
        ),
        cost_estimate=cost,
    )(x_p, w1_p, b1_p, w2_p, b2_p, w3_p, b3_p)

    return out.reshape(B_pad, 1)[:B]


def init_params(key, in_feature, hidden_size):
    """Xavier-normal weights, zero biases (matches init_weights in the spec).

    Weights stored (in, out): the kernel computes x @ W, i.e. PyTorch's
    x @ weight.T — transpose when importing nn.Linear weights.
    """
    k1, k2, k3 = jax.random.split(key, 3)

    def xavier_normal(k, fan_in, fan_out):
        std = (2.0 / (fan_in + fan_out)) ** 0.5
        return std * jax.random.normal(k, (fan_in, fan_out), dtype=jnp.float32)

    return {
        "w1": xavier_normal(k1, in_feature, hidden_size),
        "b1": jnp.zeros((1, hidden_size), jnp.float32),
        "w2": xavier_normal(k2, hidden_size, hidden_size),
        "b2": jnp.zeros((1, hidden_size), jnp.float32),
        "w3": xavier_normal(k3, hidden_size, 1),
        "b3": jnp.zeros((1, 1), jnp.float32),
    }


if __name__ == "__main__":
    key = jax.random.PRNGKey(0)
    k_x, k_p = jax.random.split(key)

    B, in_feature, hidden_size = 32, 32, 32
    x = jax.random.normal(k_x, (B, in_feature), dtype=jnp.float32)
    params = init_params(k_p, in_feature, hidden_size)

    y = adversarial_network_forward(x, params)
    jax.block_until_ready(y)

    # Pure-JAX f32 reference (kernel uses bf16 matmul operands -> looser tol).
    h1 = jnp.maximum(x @ params["w1"] + params["b1"], 0.0)
    h2 = jnp.maximum(h1 @ params["w2"] + params["b2"], 0.0)
    y_ref = jax.nn.sigmoid(h2 @ params["w3"] + params["b3"])

    assert y.shape == (B, 1)
    err = float(jnp.max(jnp.abs(y - y_ref)))
    assert jnp.allclose(y, y_ref, atol=2e-2, rtol=2e-2), err

    print("KERNEL_OK")
</pallas_src>

<mosaic_0001>
module attributes {stable_mosaic.version = 11 : i64} {
  func.func @adv_net_kernel(%arg0: i32, %arg1: i32, %arg2: memref<32x128xbf16, #tpu.memory_space<vmem>>, %arg3: memref<128x128xbf16, #tpu.memory_space<vmem>>, %arg4: memref<1x128xf32, #tpu.memory_space<vmem>>, %arg5: memref<128x128xbf16, #tpu.memory_space<vmem>>, %arg6: memref<1x128xf32, #tpu.memory_space<vmem>>, %arg7: memref<1x128xf32, #tpu.memory_space<vmem>>, %arg8: memref<1xf32, #tpu.memory_space<smem>>, %arg9: memref<1x1x32xf32, #tpu.memory_space<vmem>>, %arg10: memref<32x128xf32, #tpu.memory_space<vmem>>) attributes {dimension_semantics = [#tpu.dimension_semantics<parallel>, #tpu.dimension_semantics<arbitrary>], iteration_bounds = array<i64: 1, 1>, scalar_prefetch = 0 : i64, scratch_operands = 1 : i64, tpu.core_type = #tpu.core_type<tc>, window_params = [{transform_indices = @transform_0, window_bounds = array<i64: 32, 128>}, {transform_indices = @transform_1, window_bounds = array<i64: 128, 128>}, {pipeline_mode = #tpu.pipeline_mode<synchronous>, transform_indices = @transform_2, window_bounds = array<i64: 1, 128>}, {pipeline_mode = #tpu.pipeline_mode<synchronous>, transform_indices = @transform_3, window_bounds = array<i64: 128, 128>}, {pipeline_mode = #tpu.pipeline_mode<synchronous>, transform_indices = @transform_4, window_bounds = array<i64: 1, 128>}, {pipeline_mode = #tpu.pipeline_mode<synchronous>, transform_indices = @transform_5, window_bounds = array<i64: 1, 128>}, {transform_indices = @transform_6, window_bounds = array<i64: 1>}, {transform_indices = @transform_7, window_bounds = array<i64: 1, 1, 32>}]} {
    %c0_i32 = arith.constant 0 : i32
    %0 = arith.cmpi eq, %arg1, %c0_i32 : i32
    %1 = arith.extui %0 : i1 to i32
    %c0_i32_0 = arith.constant 0 : i32
    %2 = arith.cmpi ne, %1, %c0_i32_0 : i32
    scf.if %2 {
      %cst_10 = arith.constant 0.000000e+00 : f32
      %12 = vector.broadcast %cst_10 : f32 to vector<32x128xf32>
      %c0_11 = arith.constant 0 : index
      %c0_12 = arith.constant 0 : index
      %13 = vector.load %arg10[%c0_11, %c0_12] : memref<32x128xf32, #tpu.memory_space<vmem>>, vector<32x128xf32>
      tpu.vector_store %arg10[%c0_11, %c0_12], %12 {strides = array<i32>} : memref<32x128xf32, #tpu.memory_space<vmem>>, vector<32x128xf32>,
    } else {
    }
    %c0 = arith.constant 0 : index
    %c0_1 = arith.constant 0 : index
    %3 = vector.load %arg10[%c0, %c0_1] : memref<32x128xf32, #tpu.memory_space<vmem>>, vector<32x128xf32>
    %c0_2 = arith.constant 0 : index
    %c0_3 = arith.constant 0 : index
    %4 = vector.load %arg2[%c0_2, %c0_3] : memref<32x128xbf16, #tpu.memory_space<vmem>>, vector<32x128xbf16>
    %c0_4 = arith.constant 0 : index
    %c0_5 = arith.constant 0 : index
    %5 = vector.load %arg3[%c0_4, %c0_5] : memref<128x128xbf16, #tpu.memory_space<vmem>>, vector<128x128xbf16>
    %cst = arith.constant dense<0.000000e+00> : vector<32x128xf32>
    %6 = tpu.matmul %4, %5, %cst {dimension_numbers = #tpu.dot_dimension_numbers<[1], [0], [0], [1], [0, 0, 1, 1], [], []>} : vector<32x128xbf16>, vector<128x128xbf16>, vector<32x128xf32> -> vector<32x128xf32>
    %7 = arith.addf %3, %6 : vector<32x128xf32>
    %c0_6 = arith.constant 0 : index
    %c0_7 = arith.constant 0 : index
    %8 = vector.load %arg10[%c0_6, %c0_7] : memref<32x128xf32, #tpu.memory_space<vmem>>, vector<32x128xf32>
    tpu.vector_store %arg10[%c0_6, %c0_7], %7 {strides = array<i32>} : memref<32x128xf32, #tpu.memory_space<vmem>>, vector<32x128xf32>,
    %c0_i32_8 = arith.constant 0 : i32
    %9 = arith.cmpi eq, %arg1, %c0_i32_8 : i32
    %10 = arith.extui %9 : i1 to i32
    %c0_i32_9 = arith.constant 0 : i32
    %11 = arith.cmpi ne, %10, %c0_i32_9 : i32
    scf.if %11 {
      %c0_10 = arith.constant 0 : index
      %c0_11 = arith.constant 0 : index
      %12 = vector.load %arg10[%c0_10, %c0_11] : memref<32x128xf32, #tpu.memory_space<vmem>>, vector<32x128xf32>
      %c0_12 = arith.constant 0 : index
      %c0_13 = arith.constant 0 : index
      %13 = vector.load %arg4[%c0_12, %c0_13] : memref<1x128xf32, #tpu.memory_space<vmem>>, vector<1x128xf32>
      %14 = vector.broadcast %13 : vector<1x128xf32> to vector<32x128xf32>
      %15 = arith.addf %12, %14 : vector<32x128xf32>
      %cst_14 = arith.constant 0.000000e+00 : f32
      %16 = vector.broadcast %cst_14 : f32 to vector<32x128xf32>
      %17 = arith.maximumf %15, %16 : vector<32x128xf32>
      %18 = arith.truncf %17 : vector<32x128xf32> to vector<32x128xbf16>
      %c0_15 = arith.constant 0 : index
      %c0_16 = arith.constant 0 : index
      %19 = vector.load %arg5[%c0_15, %c0_16] : memref<128x128xbf16, #tpu.memory_space<vmem>>, vector<128x128xbf16>
      %cst_17 = arith.constant dense<0.000000e+00> : vector<32x128xf32>
      %20 = tpu.matmul %18, %19, %cst_17 {dimension_numbers = #tpu.dot_dimension_numbers<[1], [0], [0], [1], [0, 0, 1, 1], [], []>} : vector<32x128xbf16>, vector<128x128xbf16>, vector<32x128xf32> -> vector<32x128xf32>
      %c0_18 = arith.constant 0 : index
      %c0_19 = arith.constant 0 : index
      %21 = vector.load %arg6[%c0_18, %c0_19] : memref<1x128xf32, #tpu.memory_space<vmem>>, vector<1x128xf32>
      %22 = vector.broadcast %21 : vector<1x128xf32> to vector<32x128xf32>
      %23 = arith.addf %20, %22 : vector<32x128xf32>
      %cst_20 = arith.constant 0.000000e+00 : f32
      %24 = vector.broadcast %cst_20 : f32 to vector<32x128xf32>
      %25 = arith.maximumf %23, %24 : vector<32x128xf32>
      %c0_21 = arith.constant 0 : index
      %c0_22 = arith.constant 0 : index
      %26 = vector.load %arg7[%c0_21, %c0_22] : memref<1x128xf32, #tpu.memory_space<vmem>>, vector<1x128xf32>
      %27 = vector.broadcast %26 : vector<1x128xf32> to vector<32x128xf32>
      %28 = arith.mulf %25, %27 : vector<32x128xf32>
      %cst_23 = arith.constant dense<0.000000e+00> : vector<32xf32>
      %29 = vector.multi_reduction <add>, %28, %cst_23 [1] : vector<32x128xf32> to vector<32xf32>
      %c0_24 = arith.constant 0 : index
      %30 = memref.load %arg8[%c0_24] : memref<1xf32, #tpu.memory_space<smem>>
      %31 = vector.broadcast %30 : f32 to vector<32xf32>
      %32 = arith.addf %29, %31 : vector<32xf32>
      %33 = arith.negf %32 : vector<32xf32>
      %34 = math.exp %33 : vector<32xf32>
      %cst_25 = arith.constant 1.000000e+00 : f32
      %35 = vector.broadcast %cst_25 : f32 to vector<32xf32>
      %36 = arith.addf %35, %34 : vector<32xf32>
      %37 = arith.divf %35, %36 : vector<32xf32>
      %38 = vector.shape_cast %37 : vector<32xf32> to vector<1x1x32xf32>
      %c0_26 = arith.constant 0 : index
      %c0_27 = arith.constant 0 : index
      %c0_28 = arith.constant 0 : index
      %39 = vector.load %arg9[%c0_26, %c0_27, %c0_28] : memref<1x1x32xf32, #tpu.memory_space<vmem>>, vector<1x1x32xf32>
      tpu.vector_store %arg9[%c0_26, %c0_27, %c0_28], %38 {strides = array<i32>} : memref<1x1x32xf32, #tpu.memory_space<vmem>>, vector<1x1x32xf32>,
    } else {
    }
    return
  }
  func.func @transform_0(%arg0: i32, %arg1: i32) -> (i32, i32) {
    %c0_i32 = arith.constant 0 : i32
    return %arg0, %arg1 : i32, i32
  }
  func.func @transform_1(%arg0: i32, %arg1: i32) -> (i32, i32) {
    %c0_i32 = arith.constant 0 : i32
    %c0_i32_0 = arith.constant 0 : i32
    return %arg1, %c0_i32 : i32, i32
  }
  func.func @transform_2(%arg0: i32, %arg1: i32) -> (i32, i32) {
    %c0_i32 = arith.constant 0 : i32
    %c0_i32_0 = arith.constant 0 : i32
    %c0_i32_1 = arith.constant 0 : i32
    return %c0_i32, %c0_i32_0 : i32, i32
  }
  func.func @transform_3(%arg0: i32, %arg1: i32) -> (i32, i32) {
    %c0_i32 = arith.constant 0 : i32
    %c0_i32_0 = arith.constant 0 : i32
    %c0_i32_1 = arith.constant 0 : i32
    return %c0_i32, %c0_i32_0 : i32, i32
  }
  func.func @transform_4(%arg0: i32, %arg1: i32) -> (i32, i32) {
    %c0_i32 = arith.constant 0 : i32
    %c0_i32_0 = arith.constant 0 : i32
    %c0_i32_1 = arith.constant 0 : i32
    return %c0_i32, %c0_i32_0 : i32, i32
  }
  func.func @transform_5(%arg0: i32, %arg1: i32) -> (i32, i32) {
    %c0_i32 = arith.constant 0 : i32
    %c0_i32_0 = arith.constant 0 : i32
    %c0_i32_1 = arith.constant 0 : i32
    return %c0_i32, %c0_i32_0 : i32, i32
  }
  func.func @transform_6(%arg0: i32, %arg1: i32) -> i32 {
    %c0_i32 = arith.constant 0 : i32
    %c0_i32_0 = arith.constant 0 : i32
    return %c0_i32 : i32
  }
  func.func @transform_7(%arg0: i32, %arg1: i32) -> (i32, i32, i32) {
    %c0_i32 = arith.constant 0 : i32
    %c0_i32_0 = arith.constant 0 : i32
    %c0_i32_1 = arith.constant 0 : i32
    return %arg0, %c0_i32, %c0_i32_0 : i32, i32, i32
  }
}

</mosaic_0001>

<llo_original>
// kernel: tpu_custom_call.1
$region0: #{tpu_custom_call.1}
  #allocation0 [shape = 'u32[]', space=smem, size = 0x4, offset = 0x4, fixed_abs, tag = 'smem constant byte address 0x4 - core index']
  #allocation1 [shape = 'u32[144,128]{1,0:T(1,128)}', space=vmem, size = 0x12000, scoped, tag = 'internal scratch']
  #allocation2 [shape = 'f32[32,128]{1,0:T(8,128)}', space=vmem, size = 0x4000, scoped, tag = 'scratch operand']
  #allocation3 [shape = 'f32[1]{0:T(128)S(6)}', space=smem, size = 0x200, scoped, tag = 'scoped memory for tpu_custom_call.1']
  %s0 = inlined_call_operand.hbm [shape: bf16[32,128], index: 0, kind: input, shape index: {}]
  %s1 = inlined_call_operand.hbm [shape: bf16[128,128], index: 1, kind: input, shape index: {}]
  %s2 = inlined_call_operand.vmem [shape: f32[1,128], index: 2, kind: input, shape index: {}]
  %s3 = inlined_call_operand.hbm [shape: bf16[128,128], index: 3, kind: input, shape index: {}]
  %s4 = inlined_call_operand.vmem [shape: f32[1,128], index: 4, kind: input, shape index: {}]
  %s5 = inlined_call_operand.vmem [shape: f32[1,128], index: 5, kind: input, shape index: {}]
  %s6 = inlined_call_operand.<no memory space> [shape: f32[1], index: 6, kind: input, shape index: {}]
  %s7 = inlined_call_operand.hbm [shape: f32[1,1,32], index: 7, kind: output, shape index: {}]
  %s8 = sld [smem:[#allocation0]]
  $region58: #{tpu_custom_call.1} parent=0
    _
  %s10 = ssub.s32 1, %s8
  %s11 = scalar_select 0, %s10, %s8
  %12 = sst [smem:[#allocation3]] %s6
  $region1: #{tpu_custom_call.1} parent=0
    #allocation4 [shape = 'u8[8192]{0}', space=vmem, size = 0x2000, scoped, tag = 'input window, operand 0, single buffered']
    #allocation5 [shape = 's32[1]{0}', space=sflag, size = 0x4, scoped, tag = 'scoped memory for tpu_custom_call.1']
    #allocation6 [shape = 's32[1]{0}', space=sflag, size = 0x4, scoped, tag = 'scoped memory for tpu_custom_call.1']
    #allocation7 [shape = 'u8[32768]{0}', space=vmem, size = 0x8000, scoped, tag = 'input window, operand 1, single buffered']
    #allocation8 [shape = 's32[1]{0}', space=sflag, size = 0x4, scoped, tag = 'scoped memory for tpu_custom_call.1']
    #allocation9 [shape = 'u8[32768]{0}', space=vmem, size = 0x8000, scoped, tag = 'input window, operand 3, single buffered']
    #allocation10 [shape = 'u8[512]{0}', space=vmem, size = 0x400, scoped, tag = 'output window, operand 0, single buffered']
    %13 = vsyncpa [#allocation5], 0
    %14 = vsyncpa [#allocation8], 0
    %15 = vsyncpa [#allocation6], 0
    // Predicated region
    $region2: #{tpu_custom_call.1} parent=1 // pred_check
      _
    $region3: #{tpu_custom_call.1} parent=1 // pred_check_branch
      %17 = sbr.rel (0) target = $region5
    $region4: #{tpu_custom_call.1} parent=1 // pred_region
      %s19 = ssub.s32 256, 256
      %20 = vsyncadd [#allocation5], %s19
      %s21 = sshll.u32 [#allocation4], 4
      %s22 = int_to_ptr.vmem [resolvable:$true] %s21
      %27 = dma.hbm_to_vmem [thread:$0]  %s0, 256, %s22, [#allocation5], 64, 64, 4
    $region5: #{tpu_custom_call.1} parent=1 // pred_fallthru
      _
    // Predicated region
    $region6: #{tpu_custom_call.1} parent=1 // pred_check
      _
    $region7: #{tpu_custom_call.1} parent=1 // pred_check_branch
      %29 = sbr.rel (0) target = $region9
    $region8: #{tpu_custom_call.1} parent=1 // pred_region
      %s31 = ssub.s32 1024, 1024
      %32 = vsyncadd [#allocation8], %s31
      %s33 = sshll.u32 [#allocation7], 4
      %s34 = int_to_ptr.vmem [resolvable:$true] %s33
      %39 = dma.hbm_to_vmem [thread:$0]  %s1, 1024, %s34, [#allocation8], 64, 64, 4
    $region9: #{tpu_custom_call.1} parent=1 // pred_fallthru
      _
    // Predicated region
    $region10: #{tpu_custom_call.1} parent=1 // pred_check
      _
    $region11: #{tpu_custom_call.1} parent=1 // pred_check_branch
      %41 = sbr.rel (0) target = $region13
    $region12: #{tpu_custom_call.1} parent=1 // pred_region
      _
    $region13: #{tpu_custom_call.1} parent=1 // pred_fallthru
      _
    // Predicated region
    $region14: #{tpu_custom_call.1} parent=1 // pred_check
      _
    $region15: #{tpu_custom_call.1} parent=1 // pred_check_branch
      %43 = sbr.rel (0) target = $region17
    $region16: #{tpu_custom_call.1} parent=1 // pred_region
      %s45 = ssub.s32 1024, 1024
      %46 = vsyncadd [#allocation8], %s45
      %s47 = sshll.u32 [#allocation9], 4
      %s48 = int_to_ptr.vmem [resolvable:$true] %s47
      %53 = dma.hbm_to_vmem [thread:$0]  %s3, 1024, %s48, [#allocation8], 64, 64, 4
    $region17: #{tpu_custom_call.1} parent=1 // pred_fallthru
      _
    // Predicated region
    $region18: #{tpu_custom_call.1} parent=1 // pred_check
      _
    $region19: #{tpu_custom_call.1} parent=1 // pred_check_branch
      %55 = sbr.rel (0) target = $region21
    $region20: #{tpu_custom_call.1} parent=1 // pred_region
      _
    $region21: #{tpu_custom_call.1} parent=1 // pred_fallthru
      _
    // Predicated region
    $region22: #{tpu_custom_call.1} parent=1 // pred_check
      _
    $region23: #{tpu_custom_call.1} parent=1 // pred_check_branch
      %57 = sbr.rel (0) target = $region25
    $region24: #{tpu_custom_call.1} parent=1 // pred_region
      _
    $region25: #{tpu_custom_call.1} parent=1 // pred_fallthru
      _
    // Predicated region
    $region26: #{tpu_custom_call.1} parent=1 // pred_check
      _
    $region27: #{tpu_custom_call.1} parent=1 // pred_check_branch
      %59 = sbr.rel (0) target = $region29
    $region28: #{tpu_custom_call.1} parent=1 // pred_region
      _
    $region29: #{tpu_custom_call.1} parent=1 // pred_fallthru
      _
    // Predicated region
    $region30: #{tpu_custom_call.1} parent=1 // pred_check
      _
    $region31: #{tpu_custom_call.1} parent=1 // pred_check_branch
      %61 = sbr.rel (0) target = $region33
    $region32: #{tpu_custom_call.1} parent=1 // pred_region
      %62 = dma.done [#allocation5], 256
    $region33: #{tpu_custom_call.1} parent=1 // pred_fallthru
      _
    // Predicated region
    $region34: #{tpu_custom_call.1} parent=1 // pred_check
      _
    $region35: #{tpu_custom_call.1} parent=1 // pred_check_branch
      %64 = sbr.rel (0) target = $region37
    $region36: #{tpu_custom_call.1} parent=1 // pred_region
      %65 = dma.done [#allocation8], 1024
    $region37: #{tpu_custom_call.1} parent=1 // pred_fallthru
      _
    // Predicated region
    $region38: #{tpu_custom_call.1} parent=1 // pred_check
      _
    $region39: #{tpu_custom_call.1} parent=1 // pred_check_branch
      %67 = sbr.rel (0) target = $region41
    $region40: #{tpu_custom_call.1} parent=1 // pred_region
      %68 = dma.done [#allocation8], 1024
    $region41: #{tpu_custom_call.1} parent=1 // pred_fallthru
      _
    %p70 = scmp.eq.s32.totalorder 0, 0
    // Predicated region
    $region42: #{tpu_custom_call.1} parent=1 // pred_check
      %p71 = pneg %p70
    $region43: #{tpu_custom_call.1} parent=1 // pred_check_branch
      %73 = sbr.rel (%p71) target = $region45
    $region44: #{tpu_custom_call.1} parent=1 // pred_region
      %74 = vst [vmem:[#allocation2] sm:$0xff] 0.0
      %75 = vst [vmem:[#allocation2 + $0x8] sm:$0xff] 0.0
      %76 = vst [vmem:[#allocation2 + $0x10] sm:$0xff] 0.0
      %77 = vst [vmem:[#allocation2 + $0x18] sm:$0xff] 0.0
    $region45: #{tpu_custom_call.1} parent=1 // pred_fallthru
      _
    %v78 = vld [vmem:[#allocation2] sm:$0xff]
    %v79 = vld [vmem:[#allocation2 + $0x8] sm:$0xff]
    %v80 = vld [vmem:[#allocation2 + $0x10] sm:$0xff]
    %v81 = vld [vmem:[#allocation2 + $0x18] sm:$0xff]
    %v82 = vld [vmem:[#allocation4] sm:$0xf]
    %v83 = vld [vmem:[#allocation4 + $0x4] sm:$0xf]
    %v84 = vld [vmem:[#allocation4 + $0x8] sm:$0xf]
    %v85 = vld [vmem:[#allocation4 + $0xc] sm:$0xf]
    %v86 = vld [vmem:[#allocation7] sm:$0xf]
    %v87 = vld [vmem:[#allocation7 + $0x4] sm:$0xf]
    %v88 = vld [vmem:[#allocation7 + $0x8] sm:$0xf]
    %v89 = vld [vmem:[#allocation7 + $0xc] sm:$0xf]
    %v90 = vld [vmem:[#allocation7 + $0x10] sm:$0xf]
    %v91 = vld [vmem:[#allocation7 + $0x14] sm:$0xf]
    %v92 = vld [vmem:[#allocation7 + $0x18] sm:$0xf]
    %v93 = vld [vmem:[#allocation7 + $0x1c] sm:$0xf]
    %v94 = vld [vmem:[#allocation7 + $0x20] sm:$0xf]
    %v95 = vld [vmem:[#allocation7 + $0x24] sm:$0xf]
    %v96 = vld [vmem:[#allocation7 + $0x28] sm:$0xf]
    %v97 = vld [vmem:[#allocation7 + $0x2c] sm:$0xf]
    %v98 = vld [vmem:[#allocation7 + $0x30] sm:$0xf]
    %v99 = vld [vmem:[#allocation7 + $0x34] sm:$0xf]
    %v100 = vld [vmem:[#allocation7 + $0x38] sm:$0xf]
    %v101 = vld [vmem:[#allocation7 + $0x3c] sm:$0xf]
    %v106 = vunpack.c.l.b16 %v82
    %v107 = vunpack.c.l.b16 %v83
    %v108 = vunpack.c.l.b16 %v84
    %v109 = vunpack.c.l.b16 %v85
    %v110 = vpack.c.b16 %v107, %v106
    %v111 = vpack.c.b16 %v109, %v108
    %v130 = vunpack.c.l.b16 %v86
    %v131 = vunpack.c.l.b16 %v87
    %v132 = vunpack.c.l.b16 %v88
    %v133 = vunpack.c.l.b16 %v89
    %v134 = vunpack.c.l.b16 %v90
    %v135 = vunpack.c.l.b16 %v91
    %v136 = vunpack.c.l.b16 %v92
    %v137 = vunpack.c.l.b16 %v93
    %v138 = vunpack.c.l.b16 %v94
    %v139 = vunpack.c.l.b16 %v95
    %v140 = vunpack.c.l.b16 %v96
    %v141 = vunpack.c.l.b16 %v97
    %v142 = vunpack.c.l.b16 %v98
    %v143 = vunpack.c.l.b16 %v99
    %v144 = vunpack.c.l.b16 %v100
    %v145 = vunpack.c.l.b16 %v101
    %v146 = vpack.c.b16 %v131, %v130
    %v147 = vpack.c.b16 %v133, %v132
    %v148 = vpack.c.b16 %v135, %v134
    %v149 = vpack.c.b16 %v137, %v136
    %v150 = vpack.c.b16 %v139, %v138
    %v151 = vpack.c.b16 %v141, %v140
    %v152 = vpack.c.b16 %v143, %v142
    %v153 = vpack.c.b16 %v145, %v144
    %162 = vmatprep.subr.bf16.mxu0 0
    %163 = vmatpush1.bf16.msra.mxu0 %v146
    %164 = vmatprep.subr.bf16.mxu0 0
    %165 = vmatpush1.bf16.msra.mxu0 %v147
    %166 = vmatprep.subr.bf16.mxu0 0
    %167 = vmatpush1.bf16.msra.mxu0 %v148
    %168 = vmatprep.subr.bf16.mxu0 0
    %169 = vmatpush1.bf16.msra.mxu0 %v149
    %170 = vmatprep.subr.bf16.mxu0 0
    %171 = vmatpush1.bf16.msra.mxu0 %v150
    %172 = vmatprep.subr.bf16.mxu0 0
    %173 = vmatpush1.bf16.msra.mxu0 %v151
    %174 = vmatprep.subr.bf16.mxu0 0
    %175 = vmatpush1.bf16.msra.mxu0 %v152
    %176 = vmatprep.subr.bf16.mxu0 0
    %177 = vmatpush1.bf16.msra.mxu0 %v153
    %178 = vmatprep.subr.bf16.mxu0 0
    %179 = vmatpush1.bf16.msra.mxu0 0
    %180 = vmatprep.subr.bf16.mxu0 0
    %181 = vmatpush1.bf16.msra.mxu0 0
    %182 = vmatprep.subr.bf16.mxu0 0
    %183 = vmatpush1.bf16.msra.mxu0 0
    %184 = vmatprep.subr.bf16.mxu0 0
    %185 = vmatpush1.bf16.msra.mxu0 0
    %186 = vmatprep.subr.bf16.mxu0 0
    %187 = vmatpush1.bf16.msra.mxu0 0
    %188 = vmatprep.subr.bf16.mxu0 0
    %189 = vmatpush1.bf16.msra.mxu0 0
    %190 = vmatprep.subr.bf16.mxu0 0
    %191 = vmatpush1.bf16.msra.mxu0 0
    %192 = vmatprep.subr.bf16.mxu0 0
    %193 = vmatpush1.bf16.msra.mxu0 0
    %194 = vmatprep.mubr.bf16.mxu0 0
    %195 = vmatmul.mubr.bf16.gmra.mrb[0].mxu0 %v110
    %v196 = vpop.f32.mrb[0].mxu0
    %v197 = vadd.f32 0.0, %v196
    %v198 = vpop.f32.mrb[0].mxu0
    %v199 = vpop.f32.mrb[0].mxu0
    %v200 = vadd.f32 0.0, %v199
    %v201 = vpop.f32.mrb[0].mxu0
    %202 = vmatprep.mubr.bf16.mxu0 0
    %203 = vmatmul.mubr.bf16.gmra.mrb[0].mxu0 %v111
    %v204 = vpop.f32.mrb[0].mxu0
    %v205 = vadd.f32 0.0, %v204
    %v206 = vpop.f32.mrb[0].mxu0
    %v207 = vpop.f32.mrb[0].mxu0
    %v208 = vadd.f32 0.0, %v207
    %v209 = vpop.f32.mrb[0].mxu0
    %210 = vdwg.mxu0
    %v211 = vadd.f32 %v78, %v197
    %v212 = vadd.f32 %v79, %v200
    %v213 = vadd.f32 %v80, %v205
    %v214 = vadd.f32 %v81, %v208
    %215 = vst [vmem:[#allocation2] sm:$0xff] %v211
    %216 = vst [vmem:[#allocation2 + $0x8] sm:$0xff] %v212
    %217 = vst [vmem:[#allocation2 + $0x10] sm:$0xff] %v213
    %218 = vst [vmem:[#allocation2 + $0x18] sm:$0xff] %v214
    // Predicated region
    $region46: #{tpu_custom_call.1} parent=1 // pred_check
      %p219 = pneg %p70
    $region47: #{tpu_custom_call.1} parent=1 // pred_check_branch
      %221 = sbr.rel (%p219) target = $region49
    $region48: #{tpu_custom_call.1} parent=1 // pred_region
      %v222 = vld [vmem:[#allocation2] sm:$0xff]
      %v223 = vld [vmem:[#allocation2 + $0x8] sm:$0xff]
      %v224 = vld [vmem:[#allocation2 + $0x10] sm:$0xff]
      %v225 = vld [vmem:[#allocation2 + $0x18] sm:$0xff]
      %v226 = vld [vmem:[%s2] sm:$0x1]
      %v228 = vlaneseq
      %v229 = vshrl.u32 %v228, 7
      %v230 = vsub.s32 0, %v229
      %v231 = vrot.slane %v226, %v230
      %v233 = vadd.f32 %v222, %v231
      %v234 = vadd.f32 %v223, %v231
      %v235 = vadd.f32 %v224, %v231
      %v236 = vadd.f32 %v225, %v231
      %v237 = vmax.f32 %v233, 0.0
      %v238 = vmax.f32 %v234, 0.0
      %v239 = vmax.f32 %v235, 0.0
      %v240 = vmax.f32 %v236, 0.0
      %v241 = vpack.c.bf16 %v238, %v237
      %v242 = vpack.c.bf16 %v240, %v239
      %v243 = vld [vmem:[#allocation9] sm:$0xf]
      %v244 = vld [vmem:[#allocation9 + $0x4] sm:$0xf]
      %v245 = vld [vmem:[#allocation9 + $0x8] sm:$0xf]
      %v246 = vld [vmem:[#allocation9 + $0xc] sm:$0xf]
      %v247 = vld [vmem:[#allocation9 + $0x10] sm:$0xf]
      %v248 = vld [vmem:[#allocation9 + $0x14] sm:$0xf]
      %v249 = vld [vmem:[#allocation9 + $0x18] sm:$0xf]
      %v250 = vld [vmem:[#allocation9 + $0x1c] sm:$0xf]
      %v251 = vld [vmem:[#allocation9 + $0x20] sm:$0xf]
      %v252 = vld [vmem:[#allocation9 + $0x24] sm:$0xf]
      %v253 = vld [vmem:[#allocation9 + $0x28] sm:$0xf]
      %v254 = vld [vmem:[#allocation9 + $0x2c] sm:$0xf]
      %v255 = vld [vmem:[#allocation9 + $0x30] sm:$0xf]
      %v256 = vld [vmem:[#allocation9 + $0x34] sm:$0xf]
      %v257 = vld [vmem:[#allocation9 + $0x38] sm:$0xf]
      %v258 = vld [vmem:[#allocation9 + $0x3c] sm:$0xf]
      %v259 = vld [vmem:[%s4] sm:$0x1]
      %v261 = vlaneseq
      %v262 = vshrl.u32 %v261, 7
      %v263 = vsub.s32 0, %v262
      %v264 = vrot.slane %v259, %v263
      %v282 = vunpack.c.l.b16 %v243
      %v283 = vunpack.c.l.b16 %v244
      %v284 = vunpack.c.l.b16 %v245
      %v285 = vunpack.c.l.b16 %v246
      %v286 = vunpack.c.l.b16 %v247
      %v287 = vunpack.c.l.b16 %v248
      %v288 = vunpack.c.l.b16 %v249
      %v289 = vunpack.c.l.b16 %v250
      %v290 = vunpack.c.l.b16 %v251
      %v291 = vunpack.c.l.b16 %v252
      %v292 = vunpack.c.l.b16 %v253
      %v293 = vunpack.c.l.b16 %v254
      %v294 = vunpack.c.l.b16 %v255
      %v295 = vunpack.c.l.b16 %v256
      %v296 = vunpack.c.l.b16 %v257
      %v297 = vunpack.c.l.b16 %v258
      %v298 = vpack.c.b16 %v283, %v282
      %v299 = vpack.c.b16 %v285, %v284
      %v300 = vpack.c.b16 %v287, %v286
      %v301 = vpack.c.b16 %v289, %v288
      %v302 = vpack.c.b16 %v291, %v290
      %v303 = vpack.c.b16 %v293, %v292
      %v304 = vpack.c.b16 %v295, %v294
      %v305 = vpack.c.b16 %v297, %v296
      %314 = vmatprep.subr.bf16.mxu0 0
      %315 = vmatpush1.bf16.msra.mxu0 %v298
      %316 = vmatprep.subr.bf16.mxu0 0
      %317 = vmatpush1.bf16.msra.mxu0 %v299
      %318 = vmatprep.subr.bf16.mxu0 0
      %319 = vmatpush1.bf16.msra.mxu0 %v300
      %320 = vmatprep.subr.bf16.mxu0 0
      %321 = vmatpush1.bf16.msra.mxu0 %v301
      %322 = vmatprep.subr.bf16.mxu0 0
      %323 = vmatpush1.bf16.msra.mxu0 %v302
      %324 = vmatprep.subr.bf16.mxu0 0
      %325 = vmatpush1.bf16.msra.mxu0 %v303
      %326 = vmatprep.subr.bf16.mxu0 0
      %327 = vmatpush1.bf16.msra.mxu0 %v304
      %328 = vmatprep.subr.bf16.mxu0 0
      %329 = vmatpush1.bf16.msra.mxu0 %v305
      %330 = vmatprep.subr.bf16.mxu0 0
      %331 = vmatpush1.bf16.msra.mxu0 0
      %332 = vmatprep.subr.bf16.mxu0 0
      %333 = vmatpush1.bf16.msra.mxu0 0
      %334 = vmatprep.subr.bf16.mxu0 0
      %335 = vmatpush1.bf16.msra.mxu0 0
      %336 = vmatprep.subr.bf16.mxu0 0
      %337 = vmatpush1.bf16.msra.mxu0 0
      %338 = vmatprep.subr.bf16.mxu0 0
      %339 = vmatpush1.bf16.msra.mxu0 0
      %340 = vmatprep.subr.bf16.mxu0 0
      %341 = vmatpush1.bf16.msra.mxu0 0
      %342 = vmatprep.subr.bf16.mxu0 0
      %343 = vmatpush1.bf16.msra.mxu0 0
      %344 = vmatprep.subr.bf16.mxu0 0
      %345 = vmatpush1.bf16.msra.mxu0 0
      %346 = vmatprep.mubr.bf16.mxu0 0
      %347 = vmatmul.mubr.bf16.gmra.mrb[0].mxu0 %v241
      %v348 = vpop.f32.mrb[0].mxu0
      %v349 = vadd.f32 %v264, %v348
      %v350 = vpop.f32.mrb[0].mxu0
      %v351 = vpop.f32.mrb[0].mxu0
      %v352 = vadd.f32 %v264, %v351
      %v353 = vpop.f32.mrb[0].mxu0
      %354 = vmatprep.mubr.bf16.mxu0 0
      %355 = vmatmul.mubr.bf16.gmra.mrb[0].mxu0 %v242
      %v356 = vpop.f32.mrb[0].mxu0
      %v357 = vadd.f32 %v264, %v356
      %v358 = vpop.f32.mrb[0].mxu0
      %v359 = vpop.f32.mrb[0].mxu0
      %v360 = vadd.f32 %v264, %v359
      %v361 = vpop.f32.mrb[0].mxu0
      %362 = vdwg.mxu0
      %v363 = vmax.f32 %v349, 0.0
      %v364 = vmax.f32 %v352, 0.0
      %v365 = vmax.f32 %v357, 0.0
      %v366 = vmax.f32 %v360, 0.0
      %v367 = vld [vmem:[%s5] sm:$0x1]
      %v369 = vlaneseq
      %v370 = vshrl.u32 %v369, 7
      %v371 = vsub.s32 0, %v370
      %v372 = vrot.slane %v367, %v371
      %v374 = vmul.f32 %v363, %v372
      %v375 = vmul.f32 %v364, %v372
      %v376 = vmul.f32 %v365, %v372
      %v377 = vmul.f32 %v366, %v372
      %378 = vadd.xlane.f32.xlu0 %v374
      %v379 = vpop.xlane.xlu0 %378
      %380 = vadd.xlane.f32.xlu0 %v375
      %v381 = vpop.xlane.xlu0 %380
      %382 = vadd.xlane.f32.xlu0 %v376
      %v383 = vpop.xlane.xlu0 %382
      %384 = vadd.xlane.f32.xlu0 %v377
      %v385 = vpop.xlane.xlu0 %384
      %s386 = sld [smem:[#allocation3]]
      %v387 = vstv %s386
      %v388 = vadd.f32 %v379, %v387
      %v389 = vadd.f32 %v381, %v387
      %v390 = vadd.f32 %v383, %v387
      %v391 = vadd.f32 %v385, %v387
      %v392 = vxor.u32 %v388, 2147483648
      %v393 = vxor.u32 %v389, 2147483648
      %v394 = vxor.u32 %v390, 2147483648
      %v395 = vxor.u32 %v391, 2147483648
      %v396 = vmul.f32 %v392, 1.442695
      %v397 = vpow.pop %v396
      %v398 = vmul.f32 %v393, 1.442695
      %v399 = vpow.pop %v398
      %v400 = vmul.f32 %v394, 1.442695
      %v401 = vpow.pop %v400
      %v402 = vmul.f32 %v395, 1.442695
      %v403 = vpow.pop %v402
      %v404 = vadd.f32 %v397, 1.0
      %v405 = vadd.f32 %v399, 1.0
      %v406 = vadd.f32 %v401, 1.0
      %v407 = vadd.f32 %v403, 1.0
      %v408 = vrcp.pop %v404
      %v409 = vmul.f32 1.0, %v408
      %v410 = vrcp.pop %v405
      %v411 = vmul.f32 1.0, %v410
      %v412 = vrcp.pop %v406
      %v413 = vmul.f32 1.0, %v412
      %v414 = vrcp.pop %v407
      %v415 = vmul.f32 1.0, %v414
      %v420 = vlaneseq
      %v421 = vand.u32 %v420, 127
      %v422 = vlaneseq
      %v423 = vshrl.u32 %v422, 7
      %v424 = vsub.s32 %v421, %v423
      %v425 = vrot.slane %v409, %v424
      %v426 = vadd.s32 %v421, 4294967288
      %v427 = vlaneseq
      %v428 = vshrl.u32 %v427, 7
      %v429 = vsub.s32 %v426, %v428
      %v430 = vrot.slane %v411, %v429
      %vm431 = vcmask 130112
      %v432 = vsel %vm431, %v430, %v425
      %v433 = vadd.s32 %v421, 4294967280
      %v434 = vlaneseq
      %v435 = vshrl.u32 %v434, 7
      %v436 = vsub.s32 %v433, %v435
      %v437 = vrot.slane %v413, %v436
      %vm438 = vcmask 195712
      %v439 = vsel %vm438, %v437, %v432
      %v440 = vadd.s32 %v421, 4294967272
      %v441 = vlaneseq
      %v442 = vshrl.u32 %v441, 7
      %v443 = vsub.s32 %v440, %v442
      %v444 = vrot.slane %v415, %v443
      %vm445 = vcmask 261312
      %v446 = vsel %vm445, %v444, %v439
      %vm448 = vcmask 253952
      %449 = vst.msk [vmem:[#allocation10] sm:$0x1] %vm448, %v446
    $region49: #{tpu_custom_call.1} parent=1 // pred_fallthru
      _
    // Predicated region
    $region50: #{tpu_custom_call.1} parent=1 // pred_check
      _
    $region51: #{tpu_custom_call.1} parent=1 // pred_check_branch
      %451 = sbr.rel (0) target = $region53
    $region52: #{tpu_custom_call.1} parent=1 // pred_region
      %s453 = ssub.s32 16, 16
      %454 = vsyncadd [#allocation6], %s453
      %s456 = sshll.u32 [#allocation10], 4
      %s457 = int_to_ptr.vmem [resolvable:$true] %s456
      %459 = dma.vmem_to_hbm [thread:$0]  %s457, 16, %s7, [#allocation6]
    $region53: #{tpu_custom_call.1} parent=1 // pred_fallthru
      _
    // Predicated region
    $region54: #{tpu_custom_call.1} parent=1 // pred_check
      _
    $region55: #{tpu_custom_call.1} parent=1 // pred_check_branch
      %461 = sbr.rel (0) target = $region57
    $region56: #{tpu_custom_call.1} parent=1 // pred_region
      %462 = dma.done [#allocation6], 16
    $region57: #{tpu_custom_call.1} parent=1 // pred_fallthru
      _
    %463 = vsyncpa [#allocation5], 1
    %464 = vsyncpa [#allocation8], 1
    %465 = vsyncpa [#allocation6], 1

</llo_original>
